<compile_context>
chip_gen: v7x
topology: tpu7x:2x2x1
jax: 0.10.0
libtpu: 0.0.40
codegen_flags: <defaults>
</compile_context>

<pallas_src>
import functools

import jax
import jax.numpy as jnp
from jax.experimental import pallas as pl
from jax.experimental.pallas import tpu as pltpu


_PAD_COS = -1.0e4   # padded-class cosine: s*(-1e4) -> exp() ~ 0, never a target


def _cosface_kernel(x_ref, lab_ref, tgt_ref, out_ref, m_sc, l_sc,
                    *, s, m, batch, compute_dtype):
    """One (batch-tile, class-tile) grid step with a streaming logsumexp."""
    b = pl.program_id(0)
    c = pl.program_id(1)
    nc = pl.num_programs(1)

    # Reset per-batch-tile running stats at the start of each class sweep.
    @pl.when(c == 0)
    def _():
        m_sc[...] = jnp.full(m_sc.shape, -jnp.inf, dtype=m_sc.dtype)
        l_sc[...] = jnp.zeros(l_sc.shape, dtype=l_sc.dtype)

    cd = compute_dtype
    cos = x_ref[...]                         # native dtype tile (bf16 stays packed)
    if cos.dtype != cd:
        cos = cos.astype(cd)
    tb, tc = cos.shape

    # Grid-invariant local iota; shift the labels (a (tb,1) op) instead of
    # adding c*tc to the whole tile.
    col = jax.lax.broadcasted_iota(jnp.int32, (tb, tc), 1)
    is_tgt = col == (lab_ref[...] - c * tc)

    # Fused CosFace margin -> no float one_hot is ever materialized.
    logits = jnp.where(is_tgt, cos - cd(m), cos) * cd(s)

    # Online (streaming) logsumexp across class tiles; running stats in f32.
    row_max = jnp.max(logits.astype(jnp.float32), axis=1, keepdims=True)
    m_old = m_sc[...]
    m_new = jnp.maximum(m_old, row_max)
    alpha = jnp.exp(m_old - m_new)           # 0 * 0 at c == 0 (no NaN)
    p = jnp.exp(logits - m_new.astype(cd))   # heavy exp in the compute dtype
    l_sc[...] = alpha * l_sc[...] + jnp.sum(p.astype(jnp.float32), axis=1,
                                            keepdims=True)
    m_sc[...] = m_new

    # Finalize this batch tile: mask padded rows, one lane-dense (8,128) store.
    @pl.when(c == nc - 1)
    def _():
        lse = m_new + jnp.log(l_sc[...])                             # (tb, 1)
        tgt_logit = jnp.float32(s) * (tgt_ref[...] - jnp.float32(m))  # hoisted gather
        nll = lse - tgt_logit
        rows = jax.lax.broadcasted_iota(jnp.int32, (tb, 1), 0) + b * tb
        nll = jnp.where(rows < batch, nll, 0.0)                      # drop padding
        out_ref[...] = jnp.full(out_ref.shape, jnp.sum(nll), dtype=jnp.float32)


# ----------------------------- tiling helpers ------------------------------

def _round_up(x, n):
    return (x + n - 1) // n * n


def _cdiv(a, b):
    return (a + b - 1) // b


def _vmem_capacity_bytes():
    try:
        return int(pltpu.get_tpu_info().vmem_capacity_bytes)
    except Exception:
        return 64 << 20          # assume the smallest part (v7x) if unknown


def _chip_generation():
    try:
        kind = jax.devices()[0].device_kind
    except Exception:
        return 0
    digits = "".join(ch for ch in kind if ch.isdigit())
    return int(digits[0]) if digits else 0


def _default_compute_dtype(in_dtype):
    # bf16 VPU/EUP exists on v6e/v7x only; on v5e bf16 math would just add converts.
    if jnp.dtype(in_dtype) == jnp.dtype(jnp.bfloat16) and _chip_generation() >= 6:
        return jnp.bfloat16
    return jnp.float32


def _pick_class_tile(C, max_tc=8192):
    """Lane tile over classes: multiple of 128, <= max_tc, near-balanced."""
    c128 = _round_up(C, 128)
    if c128 <= max_tc:
        return c128
    n_tiles = _cdiv(c128, max_tc)
    return _round_up(_cdiv(c128, n_tiles), 128)


def _pick_batch_tile(B, tc, min_rows, budget_bytes):
    """Sublane-aligned batch tile from a VMEM budget, capped at ~B/2 so the
    'parallel' batch axis has >= 2 blocks (both v7x TensorCores get work)."""
    # Budget counted in f32 elements: in-kernel temporaries are f32-sized.
    rows = max(min_rows, (budget_bytes // (tc * 4)) // min_rows * min_rows)
    b_full = _round_up(B, min_rows)
    half = max(min_rows, _round_up(_cdiv(B, 2), min_rows))
    return min(rows, b_full, half)


# --------------------------------- wrapper ---------------------------------

def cosface_loss(cos, labels, s=30.0, m=0.2, tb=None, tc=None,
                 compute_dtype=None):
    """CosFace loss: mean_b( -log_softmax(s*(cos - m*onehot))[b, label_b] )."""
    B, C = cos.shape
    itemsize = jnp.dtype(cos.dtype).itemsize
    min_rows = 8 if itemsize >= 4 else (16 if itemsize == 2 else 32)

    if compute_dtype is None:
        compute_dtype = _default_compute_dtype(cos.dtype)
    compute_dtype = jnp.dtype(compute_dtype).type

    vmem_cap = _vmem_capacity_bytes()
    if tc is None:
        tc = _pick_class_tile(C)
    else:
        tc = _round_up(int(tc), 128)
    if tb is None:
        tb = _pick_batch_tile(B, tc, min_rows, max(1 << 20, vmem_cap // 12))
    else:
        tb = max(min_rows, _round_up(int(tb), min_rows))

    C_pad = _round_up(C, tc)
    B_pad = _round_up(B, tb)
    nb, nc = B_pad // tb, C_pad // tc

    labels2 = labels.reshape(B, 1).astype(jnp.int32)
    # Hoisted target cosine (B scalars) -> the kernel never re-extracts it.
    tgt = jnp.take_along_axis(cos, labels2, axis=1).astype(jnp.float32)

    if C_pad > C or B_pad > B:
        cos = jnp.pad(cos, ((0, B_pad - B), (0, C_pad - C)),
                      constant_values=_PAD_COS)
    if B_pad > B:
        labels2 = jnp.pad(labels2, ((0, B_pad - B), (0, 0)))
        tgt = jnp.pad(tgt, ((0, B_pad - B), (0, 0)))

    partials = pl.pallas_call(
        functools.partial(_cosface_kernel, s=float(s), m=float(m), batch=B,
                          compute_dtype=compute_dtype),
        out_shape=jax.ShapeDtypeStruct((nb, 8, 128), jnp.float32),
        grid_spec=pltpu.PrefetchScalarGridSpec(
            num_scalar_prefetch=0,
            grid=(nb, nc),
            in_specs=[
                pl.BlockSpec((tb, tc), lambda b, c: (b, c)),   # cosine tile
                pl.BlockSpec((tb, 1), lambda b, c: (b, 0)),    # labels per row
                pl.BlockSpec((tb, 1), lambda b, c: (b, 0)),    # target cosine
            ],
            out_specs=pl.BlockSpec((1, 8, 128), lambda b, c: (b, 0, 0)),
            scratch_shapes=[pltpu.VMEM((tb, 1), jnp.float32),   # running max
                            pltpu.VMEM((tb, 1), jnp.float32)],  # running sum
        ),
        compiler_params=pltpu.CompilerParams(
            dimension_semantics=("parallel", "arbitrary"),
            vmem_limit_bytes=int(vmem_cap * 3 // 4),
        ),
    )(cos, labels2, tgt)
    # TODO(synk): optionally sweep pipeline_mode=pl.Buffered(3) on the cosine
    # in_spec if a v5e profile shows exposed DMA between class steps.

    # Tiny finalize in the wrapper: sum per-tile partials, normalize once by B.
    return jnp.sum(partials[:, 0, 0]) / jnp.float32(B)


def _cosface_ref(cos, labels, s=30.0, m=0.2):
    # Pure-JAX reference mirroring the PyTorch module.
    B, C = cos.shape
    one_hot = jax.nn.one_hot(labels, C, dtype=cos.dtype)
    output = s * (cos - one_hot * m)
    logp = jax.nn.log_softmax(output, axis=1)
    loss = -jnp.take_along_axis(logp, labels.reshape(-1, 1), axis=1)
    return loss.mean()


if __name__ == "__main__":
    key = jax.random.PRNGKey(0)
    k1, k2 = jax.random.split(key)

    # CosFace `input` is already a cosine-similarity matrix in [-1, 1].
    B, C = 16, 128
    cos = jnp.tanh(jax.random.normal(k1, (B, C), dtype=jnp.float32))
    labels = jax.random.randint(k2, (B,), 0, C, dtype=jnp.int32)

    # 1) default tiling / f32 compute; batch axis splits into >=2 tiles
    #    (dual-TensorCore path) automatically.
    loss = jax.block_until_ready(cosface_loss(cos, labels, s=30.0, m=0.2))
    ref = _cosface_ref(cos, labels, s=30.0, m=0.2)
    assert jnp.allclose(loss, ref, rtol=1e-5, atol=1e-5), (loss, ref)

    # 2) ragged B / C (neither 8- nor 128-divisible) with forced small tiles:
    #    exercises row masking, class padding and the multi-tile online
    #    logsumexp + per-tile partial-sum paths.
    B2, C2 = 30, 200
    cos2 = jnp.tanh(jax.random.normal(k1, (B2, C2), dtype=jnp.float32))
    labels2 = jax.random.randint(k2, (B2,), 0, C2, dtype=jnp.int32)
    loss2 = jax.block_until_ready(
        cosface_loss(cos2, labels2, s=30.0, m=0.2, tb=8, tc=128))
    ref2 = _cosface_ref(cos2, labels2, s=30.0, m=0.2)
    assert jnp.allclose(loss2, ref2, rtol=1e-5, atol=1e-5), (loss2, ref2)

    # 3) bf16 input, explicit f32 compute (identical behaviour on every gen).
    cos_bf16 = cos.astype(jnp.bfloat16)
    loss3 = jax.block_until_ready(
        cosface_loss(cos_bf16, labels, s=30.0, m=0.2,
                     compute_dtype=jnp.float32))
    ref3 = _cosface_ref(cos_bf16.astype(jnp.float32), labels, s=30.0, m=0.2)
    assert jnp.allclose(loss3, ref3, rtol=2e-2, atol=2e-2), (loss3, ref3)

    # 4) auto compute dtype: packed-bf16 VPU/EUP path on v6e/v7x, f32 elsewhere.
    loss4 = jax.block_until_ready(cosface_loss(cos_bf16, labels, s=30.0, m=0.2))
    assert jnp.allclose(loss4, ref3, rtol=5e-2, atol=5e-2), (loss4, ref3)

    print("KERNEL_OK")
</pallas_src>

<mosaic_0001>
module attributes {stable_mosaic.version = 11 : i64} {
  func.func @_cosface_kernel(%arg0: i32, %arg1: i32, %arg2: memref<8x128xf32, #tpu.memory_space<vmem>>, %arg3: memref<8x1xi32, #tpu.memory_space<vmem>>, %arg4: memref<8x1xf32, #tpu.memory_space<vmem>>, %arg5: memref<1x8x128xf32, #tpu.memory_space<vmem>>, %arg6: memref<8x1xf32, #tpu.memory_space<vmem>>, %arg7: memref<8x1xf32, #tpu.memory_space<vmem>>) attributes {dimension_semantics = [#tpu.dimension_semantics<parallel>, #tpu.dimension_semantics<arbitrary>], iteration_bounds = array<i64: 2, 1>, scalar_prefetch = 0 : i64, scratch_operands = 2 : i64, tpu.core_type = #tpu.core_type<tc>, window_params = [{transform_indices = @transform_0, window_bounds = array<i64: 8, 128>}, {transform_indices = @transform_1, window_bounds = array<i64: 8, 1>}, {transform_indices = @transform_2, window_bounds = array<i64: 8, 1>}, {transform_indices = @transform_3, window_bounds = array<i64: 1, 8, 128>}]} {
    %c0_i32 = arith.constant 0 : i32
    %0 = arith.cmpi eq, %arg1, %c0_i32 : i32
    %1 = arith.extui %0 : i1 to i32
    %c0_i32_0 = arith.constant 0 : i32
    %2 = arith.cmpi ne, %1, %c0_i32_0 : i32
    scf.if %2 {
      %cst_17 = arith.constant 0xFF800000 : f32
      %35 = vector.broadcast %cst_17 : f32 to vector<8x1xf32>
      %c0_18 = arith.constant 0 : index
      %c0_19 = arith.constant 0 : index
      %36 = vector.load %arg6[%c0_18, %c0_19] : memref<8x1xf32, #tpu.memory_space<vmem>>, vector<8x1xf32>
      tpu.vector_store %arg6[%c0_18, %c0_19], %35 {strides = array<i32>} : memref<8x1xf32, #tpu.memory_space<vmem>>, vector<8x1xf32>,
      %cst_20 = arith.constant 0.000000e+00 : f32
      %37 = vector.broadcast %cst_20 : f32 to vector<8x1xf32>
      %c0_21 = arith.constant 0 : index
      %c0_22 = arith.constant 0 : index
      %38 = vector.load %arg7[%c0_21, %c0_22] : memref<8x1xf32, #tpu.memory_space<vmem>>, vector<8x1xf32>
      tpu.vector_store %arg7[%c0_21, %c0_22], %37 {strides = array<i32>} : memref<8x1xf32, #tpu.memory_space<vmem>>, vector<8x1xf32>,
    } else {
    }
    %c0 = arith.constant 0 : index
    %c0_1 = arith.constant 0 : index
    %3 = vector.load %arg2[%c0, %c0_1] : memref<8x128xf32, #tpu.memory_space<vmem>>, vector<8x128xf32>
    %4 = tpu.iota {dimensions = array<i32: 1>} : vector<8x128xi32>
    %c0_2 = arith.constant 0 : index
    %c0_3 = arith.constant 0 : index
    %5 = vector.load %arg3[%c0_2, %c0_3] : memref<8x1xi32, #tpu.memory_space<vmem>>, vector<8x1xi32>
    %c128_i32 = arith.constant 128 : i32
    %6 = arith.muli %arg1, %c128_i32 : i32
    %7 = vector.broadcast %6 : i32 to vector<8x1xi32>
    %8 = arith.subi %5, %7 : vector<8x1xi32>
    %9 = vector.broadcast %8 : vector<8x1xi32> to vector<8x128xi32>
    %10 = arith.cmpi eq, %4, %9 : vector<8x128xi32>
    %cst = arith.constant 2.000000e-01 : f32
    %11 = vector.broadcast %cst : f32 to vector<8x128xf32>
    %12 = arith.subf %3, %11 : vector<8x128xf32>
    %13 = arith.select %10, %12, %3 : vector<8x128xi1>, vector<8x128xf32>
    %cst_4 = arith.constant 3.000000e+01 : f32
    %14 = vector.broadcast %cst_4 : f32 to vector<8x128xf32>
    %15 = arith.mulf %13, %14 : vector<8x128xf32>
    %cst_5 = arith.constant dense<0xFF800000> : vector<8xf32>
    %16 = vector.multi_reduction <maximumf>, %15, %cst_5 [1] : vector<8x128xf32> to vector<8xf32>
    %17 = vector.shape_cast %16 : vector<8xf32> to vector<8x1xf32>
    %c0_6 = arith.constant 0 : index
    %c0_7 = arith.constant 0 : index
    %18 = vector.load %arg6[%c0_6, %c0_7] : memref<8x1xf32, #tpu.memory_space<vmem>>, vector<8x1xf32>
    %19 = arith.maximumf %18, %17 : vector<8x1xf32>
    %20 = arith.subf %18, %19 : vector<8x1xf32>
    %21 = math.exp %20 : vector<8x1xf32>
    %22 = vector.broadcast %19 : vector<8x1xf32> to vector<8x128xf32>
    %23 = arith.subf %15, %22 : vector<8x128xf32>
    %24 = math.exp %23 : vector<8x128xf32>
    %c0_8 = arith.constant 0 : index
    %c0_9 = arith.constant 0 : index
    %25 = vector.load %arg7[%c0_8, %c0_9] : memref<8x1xf32, #tpu.memory_space<vmem>>, vector<8x1xf32>
    %26 = arith.mulf %21, %25 : vector<8x1xf32>
    %cst_10 = arith.constant dense<0.000000e+00> : vector<8xf32>
    %27 = vector.multi_reduction <add>, %24, %cst_10 [1] : vector<8x128xf32> to vector<8xf32>
    %28 = vector.shape_cast %27 : vector<8xf32> to vector<8x1xf32>
    %29 = arith.addf %26, %28 : vector<8x1xf32>
    %c0_11 = arith.constant 0 : index
    %c0_12 = arith.constant 0 : index
    %30 = vector.load %arg7[%c0_11, %c0_12] : memref<8x1xf32, #tpu.memory_space<vmem>>, vector<8x1xf32>
    tpu.vector_store %arg7[%c0_11, %c0_12], %29 {strides = array<i32>} : memref<8x1xf32, #tpu.memory_space<vmem>>, vector<8x1xf32>,
    %c0_13 = arith.constant 0 : index
    %c0_14 = arith.constant 0 : index
    %31 = vector.load %arg6[%c0_13, %c0_14] : memref<8x1xf32, #tpu.memory_space<vmem>>, vector<8x1xf32>
    tpu.vector_store %arg6[%c0_13, %c0_14], %19 {strides = array<i32>} : memref<8x1xf32, #tpu.memory_space<vmem>>, vector<8x1xf32>,
    %c0_i32_15 = arith.constant 0 : i32
    %32 = arith.cmpi eq, %arg1, %c0_i32_15 : i32
    %33 = arith.extui %32 : i1 to i32
    %c0_i32_16 = arith.constant 0 : i32
    %34 = arith.cmpi ne, %33, %c0_i32_16 : i32
    scf.if %34 {
      %c0_17 = arith.constant 0 : index
      %c0_18 = arith.constant 0 : index
      %35 = vector.load %arg7[%c0_17, %c0_18] : memref<8x1xf32, #tpu.memory_space<vmem>>, vector<8x1xf32>
      %36 = math.log %35 : vector<8x1xf32>
      %37 = arith.addf %19, %36 : vector<8x1xf32>
      %c0_19 = arith.constant 0 : index
      %c0_20 = arith.constant 0 : index
      %38 = vector.load %arg4[%c0_19, %c0_20] : memref<8x1xf32, #tpu.memory_space<vmem>>, vector<8x1xf32>
      %cst_21 = arith.constant 2.000000e-01 : f32
      %39 = vector.broadcast %cst_21 : f32 to vector<8x1xf32>
      %40 = arith.subf %38, %39 : vector<8x1xf32>
      %cst_22 = arith.constant 3.000000e+01 : f32
      %41 = vector.broadcast %cst_22 : f32 to vector<8x1xf32>
      %42 = arith.mulf %41, %40 : vector<8x1xf32>
      %43 = arith.subf %37, %42 : vector<8x1xf32>
      %44 = tpu.iota {dimensions = array<i32: 0>} : vector<8x1xi32>
      %c8_i32 = arith.constant 8 : i32
      %45 = arith.muli %arg0, %c8_i32 : i32
      %46 = vector.broadcast %45 : i32 to vector<8x1xi32>
      %47 = arith.addi %44, %46 : vector<8x1xi32>
      %c16_i32 = arith.constant 16 : i32
      %48 = vector.broadcast %c16_i32 : i32 to vector<8x1xi32>
      %49 = arith.cmpi slt, %47, %48 : vector<8x1xi32>
      %cst_23 = arith.constant 0.000000e+00 : f32
      %50 = vector.broadcast %cst_23 : f32 to vector<8x1xf32>
      %51 = arith.select %49, %43, %50 : vector<8x1xi1>, vector<8x1xf32>
      %52 = vector.shape_cast %51 : vector<8x1xf32> to vector<1x8x1xf32>
      %cst_24 = arith.constant dense<0.000000e+00> : vector<1xf32>
      %53 = vector.multi_reduction <add>, %52, %cst_24 [1, 2] : vector<1x8x1xf32> to vector<1xf32>
      %54 = vector.shape_cast %53 : vector<1xf32> to vector<1x1x1xf32>
      %55 = vector.extract %54[0, 0, 0] : f32 from vector<1x1x1xf32>
      %56 = vector.broadcast %55 : f32 to vector<1x8x128xf32>
      %c0_25 = arith.constant 0 : index
      %c0_26 = arith.constant 0 : index
      %c0_27 = arith.constant 0 : index
      %57 = vector.load %arg5[%c0_25, %c0_26, %c0_27] : memref<1x8x128xf32, #tpu.memory_space<vmem>>, vector<1x8x128xf32>
      tpu.vector_store %arg5[%c0_25, %c0_26, %c0_27], %56 {strides = array<i32>} : memref<1x8x128xf32, #tpu.memory_space<vmem>>, vector<1x8x128xf32>,
    } else {
    }
    return
  }
  func.func @transform_0(%arg0: i32, %arg1: i32) -> (i32, i32) {
    %c0_i32 = arith.constant 0 : i32
    return %arg0, %arg1 : i32, i32
  }
  func.func @transform_1(%arg0: i32, %arg1: i32) -> (i32, i32) {
    %c0_i32 = arith.constant 0 : i32
    %c0_i32_0 = arith.constant 0 : i32
    return %arg0, %c0_i32 : i32, i32
  }
  func.func @transform_2(%arg0: i32, %arg1: i32) -> (i32, i32) {
    %c0_i32 = arith.constant 0 : i32
    %c0_i32_0 = arith.constant 0 : i32
    return %arg0, %c0_i32 : i32, i32
  }
  func.func @transform_3(%arg0: i32, %arg1: i32) -> (i32, i32, i32) {
    %c0_i32 = arith.constant 0 : i32
    %c0_i32_0 = arith.constant 0 : i32
    %c0_i32_1 = arith.constant 0 : i32
    return %arg0, %c0_i32, %c0_i32_0 : i32, i32, i32
  }
}

</mosaic_0001>

<llo_original>
// kernel: tpu_custom_call.1
$region0: #{tpu_custom_call.1}
  #allocation0 [shape = 'u32[]', space=smem, size = 0x4, offset = 0x4, fixed_abs, tag = 'smem constant byte address 0x4 - core index']
  #allocation1 [shape = 'u32[144,128]{1,0:T(1,128)}', space=vmem, size = 0x12000, scoped, tag = 'internal scratch']
  #allocation2 [shape = 'f32[8,1]{1,0:T(8,128)}', space=vmem, size = 0x1000, scoped, tag = 'scratch operand']
  #allocation3 [shape = 'f32[8,1]{1,0:T(8,128)}', space=vmem, size = 0x1000, scoped, tag = 'scratch operand']
  %s0 = inlined_call_operand.vmem [shape: f32[16,128], index: 0, kind: input, shape index: {}]
  %s1 = inlined_call_operand.vmem [shape: s32[16,1], index: 1, kind: input, shape index: {}]
  %s2 = inlined_call_operand.vmem [shape: f32[16,1], index: 2, kind: input, shape index: {}]
  %s3 = inlined_call_operand.hbm [shape: f32[2,8,128], index: 3, kind: output, shape index: {}]
  %s4 = sld [smem:[#allocation0]]
  $region53: #{tpu_custom_call.1} parent=0
    _
  %s6 = ssub.s32 1, %s4
  %s7 = scalar_select 0, %s6, %s4
  $region1: #{tpu_custom_call.1} parent=0
    #allocation4 [shape = 'u8[8192]{0}', space=vmem, size = 0x2000, scoped, tag = 'output window, operand 0']
    #allocation5 [shape = 's32[2]{0}', space=sflag, size = 0x8, scoped, tag = 'scoped memory for tpu_custom_call.1']
    %8 = vsyncpa [#allocation5], 0
    %s9 = scalar_lea.sflag [#allocation5], 1
    %10 = vsyncpa %s9, 0
    loop: start=0, step=1, limit=4
    $region2: #{tpu_custom_call.1} parent=1 // loop_pre_header
      _
    $region3: #{tpu_custom_call.1} parent=1 // loop_header
      %s12 = sphi 0, %s16
      %p13 = scmp.ge.s32.totalorder %s12, 4
      %s19 = sphi 0, %s31
      %s20 = sphi 0, %s27
      %s21 = sphi 0, %s19
      %s22 = sphi 0, %s20
      %s23 = sphi 0, %s21
      %s24 = sphi 0, %s22
      %s36 = sphi 0, %s38
      %s39 = sphi 0, %s36
      %s40 = sphi 0, %s39
      %s56 = sphi 0, %s40
      %s62 = sphi 0, %s64
      %s65 = sphi 0, %s62
      %s66 = sphi 0, %s65
      %s82 = sphi 0, %s66
      %s88 = sphi 0, %s90
      %s91 = sphi 0, %s88
      %s92 = sphi 0, %s91
      %s108 = sphi 0, %s92
      %s114 = sphi 0, %s116
      %s117 = sphi 0, %s114
      %s118 = sphi 0, %s117
      %s134 = sphi 0, %s118
    $region4: #{tpu_custom_call.1} parent=1 // loop_header_branch
      %15 = sbr.rel (%p13) target = $region8
    $region5: #{tpu_custom_call.1} parent=1 // loop_body
      %s17 = ssub.s32 %s12, 1
      %s18 = ssub.s32 %s12, 2
      %s25 = sadd.s32 1, %s20
      %p26 = scmp.ge.s32.totalorder %s25, 1
      %s27 = scalar_select %p26, 0, %s25
      %s28 = sadd.s32 1, %s19
      %s29 = scalar_select %p26, %s28, %s19
      %p30 = scmp.ge.s32.totalorder %s29, 2
      %s31 = scalar_select %p30, 0, %s29
      %s32 = ssub.s32 %s19, %s31
      %s33 = ssub.s32 %s20, %s27
      %s34 = sor.u32 %s32, %s33
      %p35 = scmp.eq.s32.totalorder %s34, 0
      %s37 = sadd.s32 %s36, 1
      %s38 = scalar_select %p35, %s36, %s37
      %p41 = pneg %p35
      %p42 = scmp.eq.s32.totalorder %s12, 1
      %p43 = por %p41, %p42
      %p44 = scmp.ne.s32.totalorder %s36, %s39
      %p45 = scmp.eq.s32.totalorder %s12, 0
      %p46 = por %p44, %p45
      %p47 = scmp.ne.s32.totalorder %s36, %s39
      %p48 = scmp.eq.s32.totalorder %s17, 1
      %p49 = por %p47, %p48
      %p50 = scmp.ne.s32.totalorder %s39, %s40
      %p51 = scmp.eq.s32.totalorder %s17, 0
      %p52 = por %p50, %p51
      %p53 = scmp.ne.s32.totalorder %s39, %s40
      %p54 = scmp.eq.s32.totalorder %s18, 1
      %p55 = por %p53, %p54
      %p57 = scmp.ne.s32.totalorder %s40, %s56
      %p58 = scmp.eq.s32.totalorder %s18, 0
      %p59 = por %p57, %p58
      %s60 = ssub.s32 %s19, %s31
      %p61 = scmp.eq.s32.totalorder %s60, 0
      %s63 = sadd.s32 %s62, 1
      %s64 = scalar_select %p61, %s62, %s63
      %p67 = pneg %p61
      %p68 = scmp.eq.s32.totalorder %s12, 1
      %p69 = por %p67, %p68
      %p70 = scmp.ne.s32.totalorder %s62, %s65
      %p71 = scmp.eq.s32.totalorder %s12, 0
      %p72 = por %p70, %p71
      %p73 = scmp.ne.s32.totalorder %s62, %s65
      %p74 = scmp.eq.s32.totalorder %s17, 1
      %p75 = por %p73, %p74
      %p76 = scmp.ne.s32.totalorder %s65, %s66
      %p77 = scmp.eq.s32.totalorder %s17, 0
      %p78 = por %p76, %p77
      %p79 = scmp.ne.s32.totalorder %s65, %s66
      %p80 = scmp.eq.s32.totalorder %s18, 1
      %p81 = por %p79, %p80
      %p83 = scmp.ne.s32.totalorder %s66, %s82
      %p84 = scmp.eq.s32.totalorder %s18, 0
      %p85 = por %p83, %p84
      %s86 = ssub.s32 %s19, %s31
      %p87 = scmp.eq.s32.totalorder %s86, 0
      %s89 = sadd.s32 %s88, 1
      %s90 = scalar_select %p87, %s88, %s89
      %p93 = pneg %p87
      %p94 = scmp.eq.s32.totalorder %s12, 1
      %p95 = por %p93, %p94
      %p96 = scmp.ne.s32.totalorder %s88, %s91
      %p97 = scmp.eq.s32.totalorder %s12, 0
      %p98 = por %p96, %p97
      %p99 = scmp.ne.s32.totalorder %s88, %s91
      %p100 = scmp.eq.s32.totalorder %s17, 1
      %p101 = por %p99, %p100
      %p102 = scmp.ne.s32.totalorder %s91, %s92
      %p103 = scmp.eq.s32.totalorder %s17, 0
      %p104 = por %p102, %p103
      %p105 = scmp.ne.s32.totalorder %s91, %s92
      %p106 = scmp.eq.s32.totalorder %s18, 1
      %p107 = por %p105, %p106
      %p109 = scmp.ne.s32.totalorder %s92, %s108
      %p110 = scmp.eq.s32.totalorder %s18, 0
      %p111 = por %p109, %p110
      %s112 = ssub.s32 %s19, %s31
      %p113 = scmp.eq.s32.totalorder %s112, 0
      %s115 = sadd.s32 %s114, 1
      %s116 = scalar_select %p113, %s114, %s115
      %p119 = pneg %p113
      %p120 = scmp.eq.s32.totalorder %s12, 1
      %p121 = por %p119, %p120
      %p122 = scmp.ne.s32.totalorder %s114, %s117
      %p123 = scmp.eq.s32.totalorder %s12, 0
      %p124 = por %p122, %p123
      %p125 = scmp.ne.s32.totalorder %s114, %s117
      %p126 = scmp.eq.s32.totalorder %s17, 1
      %p127 = por %p125, %p126
      %p128 = scmp.ne.s32.totalorder %s117, %s118
      %p129 = scmp.eq.s32.totalorder %s17, 0
      %p130 = por %p128, %p129
      %p131 = scmp.ne.s32.totalorder %s117, %s118
      %p132 = scmp.eq.s32.totalorder %s18, 1
      %p133 = por %p131, %p132
      %p135 = scmp.ne.s32.totalorder %s118, %s134
      %p136 = scmp.eq.s32.totalorder %s18, 0
      %p137 = por %p135, %p136
      %p138 = scmp.le.s32.totalorder 1, %s12
      %p139 = scmp.lt.s32.totalorder %s12, 3
      %p140 = pnand %p138, %p139
      %p141 = pneg %p140
      // Predicated region
      $region9: #{tpu_custom_call.1} parent=5 // pred_check
        _
      $region10: #{tpu_custom_call.1} parent=5 // pred_check_branch
        %143 = sbr.rel (%p140) target = $region12
      $region11: #{tpu_custom_call.1} parent=5 // pred_region
        %s144 = ssub.s32 %s12, 1
      $region12: #{tpu_custom_call.1} parent=5 // pred_fallthru
        _
      %p145 = scmp.lt.s32.totalorder %s12, 2
      // Predicated region
      $region13: #{tpu_custom_call.1} parent=5 // pred_check
        %p146 = pneg %p145
      $region14: #{tpu_custom_call.1} parent=5 // pred_check_branch
        %148 = sbr.rel (%p146) target = $region16
      $region15: #{tpu_custom_call.1} parent=5 // pred_region
        // Predicated region
        $region17: #{tpu_custom_call.1} parent=15 // pred_check
          %p149 = pneg %p46
        $region18: #{tpu_custom_call.1} parent=15 // pred_check_branch
          %151 = sbr.rel (%p149) target = $region20
        $region19: #{tpu_custom_call.1} parent=15 // pred_region
          %p152 = scmp.lt.s32.totalorder %s19, 1
          %s153 = scalar_select %p152, %s19, 1
          %p154 = scmp.lt.s32.totalorder %s20, 0
          %s155 = scalar_select %p154, %s20, 0
          %s156 = sadd.s32 %s155, %s153
          %s157 = smul.addr %s156, 8
          %s158 = scalar_lea.vmem %s0, %s157
        $region20: #{tpu_custom_call.1} parent=15 // pred_fallthru
          _
        // Predicated region
        $region21: #{tpu_custom_call.1} parent=15 // pred_check
          %p159 = pneg %p72
        $region22: #{tpu_custom_call.1} parent=15 // pred_check_branch
          %161 = sbr.rel (%p159) target = $region24
        $region23: #{tpu_custom_call.1} parent=15 // pred_region
          %p162 = scmp.lt.s32.totalorder %s19, 1
          %s163 = scalar_select %p162, %s19, 1
          %s164 = smul.addr %s163, 8
          %s165 = scalar_lea.vmem %s1, %s164
        $region24: #{tpu_custom_call.1} parent=15 // pred_fallthru
          _
        // Predicated region
        $region25: #{tpu_custom_call.1} parent=15 // pred_check
          %p166 = pneg %p98
        $region26: #{tpu_custom_call.1} parent=15 // pred_check_branch
          %168 = sbr.rel (%p166) target = $region28
        $region27: #{tpu_custom_call.1} parent=15 // pred_region
          %p169 = scmp.lt.s32.totalorder %s19, 1
          %s170 = scalar_select %p169, %s19, 1
          %s171 = smul.addr %s170, 8
          %s172 = scalar_lea.vmem %s2, %s171
        $region28: #{tpu_custom_call.1} parent=15 // pred_fallthru
          _
      $region16: #{tpu_custom_call.1} parent=5 // pred_fallthru
        _
      %p173 = scmp.le.s32.totalorder 1, %s12
      %p174 = scmp.lt.s32.totalorder %s12, 3
      %p175 = pnand %p173, %p174
      %p176 = pneg %p175
      // Predicated region
      $region29: #{tpu_custom_call.1} parent=5 // pred_check
        _
      $region30: #{tpu_custom_call.1} parent=5 // pred_check_branch
        %178 = sbr.rel (%p175) target = $region32
      $region31: #{tpu_custom_call.1} parent=5 // pred_region
        %s179 = ssub.s32 %s12, 1
        %p180 = scmp.lt.s32.totalorder %s21, 1
        %s181 = scalar_select %p180, %s21, 1
        %p182 = scmp.lt.s32.totalorder %s22, 0
        %s183 = scalar_select %p182, %s22, 0
        %s184 = sadd.s32 %s183, %s181
        %s185 = smul.addr %s184, 8
        %s186 = scalar_lea.vmem %s0, %s185
        %p187 = pneg %p52
        %p188 = pneg %p49
        %p189 = scmp.lt.s32.totalorder %s21, 1
        %s190 = scalar_select %p189, %s21, 1
        %s191 = smul.addr %s190, 8
        %s192 = scalar_lea.vmem %s1, %s191
        %p193 = pneg %p78
        %p194 = pneg %p75
        %p195 = scmp.lt.s32.totalorder %s21, 1
        %s196 = scalar_select %p195, %s21, 1
        %s197 = smul.addr %s196, 8
        %s198 = scalar_lea.vmem %s2, %s197
        %p199 = pneg %p104
        %p200 = pneg %p101
        %p201 = pneg %p130
        %p202 = pneg %p127
        %s203 = sand.u32 %s117, 1
        %s204 = scalar_lea.sflag [#allocation5], %s203
        %s205 = sand.u32 %s117, 1
        %s206 = smul.addr %s205, 8
        %s207 = scalar_lea.vmem [#allocation4], %s206
        %p208 = scmp.lt.s32.totalorder %s21, 1
        %s209 = scalar_select %p208, %s21, 1
        %p210 = scmp.lt.s32.totalorder %s22, 0
        %s211 = scalar_select %p210, %s22, 0
        %s212 = sadd.s32 %s211, %s209
        %s213 = smul.addr %s212, 8
        %s214 = scalar_lea.vmem %s0, %s213
        %p215 = scmp.lt.s32.totalorder %s21, 1
        %s216 = scalar_select %p215, %s21, 1
        %s217 = smul.addr %s216, 8
        %s218 = scalar_lea.vmem %s1, %s217
        %p219 = scmp.lt.s32.totalorder %s21, 1
        %s220 = scalar_select %p219, %s21, 1
        %s221 = smul.addr %s220, 8
        %s222 = scalar_lea.vmem %s2, %s221
        %p223 = scmp.eq.s32.totalorder %s22, 0
        // Predicated region
        $region33: #{tpu_custom_call.1} parent=31 // pred_check
          %p224 = pneg %p223
        $region34: #{tpu_custom_call.1} parent=31 // pred_check_branch
          %226 = sbr.rel (%p224) target = $region36
        $region35: #{tpu_custom_call.1} parent=31 // pred_region
          %vm227 = vcmask 7168
          %228 = vst.msk [vmem:[#allocation2] sm:$0xff] %vm227, -inf
          %229 = vst.msk [vmem:[#allocation3] sm:$0xff] %vm227, 0.0
        $region36: #{tpu_custom_call.1} parent=31 // pred_fallthru
          _
        %v230 = vld [vmem:[%s214] sm:$0xff]
        %v231 = vlaneseq
        %v232 = vand.u32 %v231, 127
        %v233 = vld [vmem:[%s218] sm:$0xff]
        %s234 = smul.u32 %s22, 128
        %v235 = vstv %s234
        %v236 = vsub.s32 %v233, %v235
        %237 = vset.pattern.permute.xlu0 0
        %238 = vperm.xlu0 %237, %v236
        %v239 = vpop.permute.xlu0 %238
        %vm240 = vcmp.eq.s32.totalorder %v232, %v239
        %v241 = vsub.f32 %v230, 0.2
        %v242 = vsel %vm240, %v241, %v230
        %v243 = vmul.f32 %v242, 30.0
        %244 = vmax.xlane.f32.xlu0 %v243
        %v245 = vpop.xlane.xlu0 %244
        %v246 = vld [vmem:[#allocation2] sm:$0xff]
        %v247 = vmax.f32 %v246, %v245
        %v248 = vsub.f32 %v246, %v247
        %v249 = vmul.f32 %v248, 1.442695
        %v250 = vpow.pop %v249
        %252 = vset.pattern.permute.xlu0 0
        %253 = vperm.xlu0 %252, %v247
        %v254 = vpop.permute.xlu0 %253
        %v256 = vsub.f32 %v243, %v254
        %v257 = vmul.f32 %v256, 1.442695
        %v258 = vpow.pop %v257
        %v259 = vld [vmem:[#allocation3] sm:$0xff]
        %v260 = vmul.f32 %v250, %v259
        %261 = vadd.xlane.f32.xlu0 %v258
        %v262 = vpop.xlane.xlu0 %261
        %v263 = vadd.f32 %v260, %v262
        %vm264 = vcmask 7168
        %265 = vst.msk [vmem:[#allocation3] sm:$0xff] %vm264, %v263
        %266 = vst.msk [vmem:[#allocation2] sm:$0xff] %vm264, %v247
        // Predicated region
        $region37: #{tpu_custom_call.1} parent=31 // pred_check
          %p267 = pneg %p223
        $region38: #{tpu_custom_call.1} parent=31 // pred_check_branch
          %269 = sbr.rel (%p267) target = $region40
        $region39: #{tpu_custom_call.1} parent=31 // pred_region
          %v270 = vld [vmem:[#allocation3] sm:$0xff]
          %v271 = vlog2.pop %v270
          %v272 = vmul.f32 %v271, 0.6931472
          %v273 = vadd.f32 %v247, %v272
          %v274 = vld [vmem:[%s222] sm:$0xff]
          %v275 = vsub.f32 %v274, 0.2
          %v276 = vmul.f32 %v275, 30.0
          %v277 = vsub.f32 %v273, %v276
          %v278 = vlaneseq
          %v279 = vshrl.u32 %v278, 7
          %s280 = smul.u32 %s21, 8
          %v281 = vstv %s280
          %v282 = vadd.s32 %v279, %v281
          %vm283 = vcmp.lt.s32.totalorder %v282, 16
          %v284 = vsel %vm283, %v277, 0.0
          %v285 = vsel %vm264, %v284, 0.0
          %286 = vadd.xlane.f32.xlu0 %v285
          %v287 = vpop.xlane.xlu0 %286
          %v288 = vrot.slane %v287, 4
          %v289 = vadd.f32 %v287, %v288
          %v290 = vrot.slane %v289, 2
          %v291 = vadd.f32 %v289, %v290
          %v292 = vrot.slane %v291, 1
          %v293 = vadd.f32 %v291, %v292
          %s294 = vtos %v293
          %v295 = vstv %s294
          %296 = vst [vmem:[%s207] sm:$0xff] %v295
        $region40: #{tpu_custom_call.1} parent=31 // pred_fallthru
          _
        %s297 = sand.u32 %s117, 1
        %s298 = scalar_lea.sflag [#allocation5], %s297
        %s299 = sand.u32 %s117, 1
        %s300 = smul.addr %s299, 8
        %s301 = scalar_lea.vmem [#allocation4], %s300
        // Predicated region
        $region41: #{tpu_custom_call.1} parent=31 // pred_check
          %p302 = pneg %p127
        $region42: #{tpu_custom_call.1} parent=31 // pred_check_branch
          %304 = sbr.rel (%p302) target = $region44
        $region43: #{tpu_custom_call.1} parent=31 // pred_region
          %s306 = ssub.s32 128, 128
          %307 = vsyncadd %s298, %s306
          %s308 = smul.addr %s21, 128
          %s309 = scalar_lea.hbm %s3, %s308
          %s311 = sshll.u32 %s301, 4
          %s312 = int_to_ptr.vmem [resolvable:$true] %s311
          %314 = dma.vmem_to_hbm [thread:$0]  %s312, 128, %s309, %s298
        $region44: #{tpu_custom_call.1} parent=31 // pred_fallthru
          _
      $region32: #{tpu_custom_call.1} parent=5 // pred_fallthru
        _
      %p315 = scmp.le.s32.totalorder 2, %s12
      // Predicated region
      $region45: #{tpu_custom_call.1} parent=5 // pred_check
        %p316 = pneg %p315
      $region46: #{tpu_custom_call.1} parent=5 // pred_check_branch
        %318 = sbr.rel (%p316) target = $region48
      $region47: #{tpu_custom_call.1} parent=5 // pred_region
        %s319 = ssub.s32 %s12, 2
        // Predicated region
        $region49: #{tpu_custom_call.1} parent=47 // pred_check
          %p320 = pneg %p133
        $region50: #{tpu_custom_call.1} parent=47 // pred_check_branch
          %322 = sbr.rel (%p320) target = $region52
        $region51: #{tpu_custom_call.1} parent=47 // pred_region
          %s323 = sand.u32 %s118, 1
          %s324 = scalar_lea.sflag [#allocation5], %s323
          %s325 = sand.u32 %s118, 1
          %s326 = smul.addr %s325, 8
          %s327 = scalar_lea.vmem [#allocation4], %s326
          %328 = dma.done %s324, 128
        $region52: #{tpu_custom_call.1} parent=47 // pred_fallthru
          _
      $region48: #{tpu_custom_call.1} parent=5 // pred_fallthru
        _
    $region6: #{tpu_custom_call.1} parent=1 // loop_footer
      %s16 = sadd.s32 1, %s12
    $region7: #{tpu_custom_call.1} parent=1 // loop_footer_branch
      %11 = sbr.rel target = $region3
    $region8: #{tpu_custom_call.1} parent=1 // loop_exit
      _
    %329 = vsyncpa [#allocation5], 1
    %s330 = scalar_lea.sflag [#allocation5], 1
    %331 = vsyncpa %s330, 1

</llo_original>
